<compile_context>
chip_gen: v6e
topology: v6e:2x2x1
jax: 0.10.0
libtpu: 0.0.40
codegen_flags: <defaults>
</compile_context>

<pallas_src>
import functools

import jax
import jax.numpy as jnp
from jax.experimental import pallas as pl
from jax.experimental.pallas import tpu as pltpu


NEG_SLOPE = 0.01
LANE = 128


def _leaky_relu(x):
    # Equivalent to where(x > 0, x, a*x) for 0 < a < 1; one vmul + one vmax.
    return jnp.maximum(x, NEG_SLOPE * x)


def _mlp_kernel(num_hidden, action_size, s_ref, ap_ref, *refs):
    """Fused MLP. refs = [w0_s, w0_a, b0, (w_i, b_i) for i=1..nh-1, wo, bo, q_ref].

    Hidden feature widths are pre-padded to 128 lanes so every matmul tile,
    bias broadcast and activation is lane-dense. Matmul operands are bf16
    (weights pre-cast, activations cast in-register); accumulation and the
    elementwise epilogue are f32 on the VPU. The final store keeps only the
    first `action_size` lanes (narrow, unpadded output in HBM).
    """
    q_ref = refs[-1]
    w0s_ref, w0a_ref, b0_ref = refs[0], refs[1], refs[2]

    # Layer 0 with the concat fused: [s, ap] @ W0 == s @ W0[:S] + ap @ W0[S:].
    s_bf = s_ref[...].astype(jnp.bfloat16)
    ap_bf = ap_ref[...].astype(jnp.bfloat16)
    h = jnp.dot(s_bf, w0s_ref[...], preferred_element_type=jnp.float32)
    h = h + jnp.dot(ap_bf, w0a_ref[...], preferred_element_type=jnp.float32)
    h = _leaky_relu(h + b0_ref[...])

    idx = 3
    for _ in range(num_hidden - 1):
        w_ref, b_ref = refs[idx], refs[idx + 1]
        idx += 2
        h = jnp.dot(h.astype(jnp.bfloat16), w_ref[...],
                    preferred_element_type=jnp.float32) + b_ref[...]
        h = _leaky_relu(h)

    wo_ref, bo_ref = refs[idx], refs[idx + 1]
    q = jnp.dot(h.astype(jnp.bfloat16), wo_ref[...],
                preferred_element_type=jnp.float32) + bo_ref[...]
    # Static lane slice -> only the real action columns are stored to HBM.
    q_ref[...] = q[:, :action_size].astype(q_ref.dtype)


def _pick_batch_tile(batch, max_block_batch):
    """Single block for small batches; otherwise >=2 tiles (multiples of 8
    sublanes) so the "parallel" axis can shard across v7x's 2 TensorCores,
    capped at max_block_batch."""
    if batch <= 64:
        return batch
    half = (-(-batch // 2) + 7) // 8 * 8     # round_up(cdiv(batch, 2), 8)
    return min(max_block_batch, half)


def qactor_forward(state, action_parameters, kernel_params, action_size,
                   *, max_block_batch=1024):
    """Run the fused Pallas MLP. `kernel_params` comes from prepare_kernel_params."""
    tensors = kernel_params["tensors"]
    num_hidden = kernel_params["num_hidden"]
    flops_per_row = kernel_params["flops_per_row"]
    param_bytes = kernel_params["param_bytes"]

    batch, s_dim = state.shape
    p_dim = action_parameters.shape[1]

    tb = _pick_batch_tile(batch, max_block_batch)
    grid = (pl.cdiv(batch, tb),)

    def act_spec(width):
        return pl.BlockSpec((tb, width), lambda i: (i, 0))

    def resident_spec(shape):
        # Constant block index -> weight/bias stays resident in VMEM across steps.
        return pl.BlockSpec(shape, lambda i: (0, 0))

    in_specs = [act_spec(s_dim), act_spec(p_dim)]
    in_specs += [resident_spec(tuple(t.shape)) for t in tensors]
    # Narrow output: last block dim == full array dim (action_size), so the
    # (8,128) rule is satisfied and no padded slab ever hits HBM.
    out_spec = pl.BlockSpec((tb, action_size), lambda i: (i, 0))

    # Advisory cost hint (matmul flops + real bytes moved: f32 activations in,
    # bf16/f32 params once, f32 narrow Q out).
    bytes_accessed = (4 * batch * (s_dim + p_dim)        # state + action params in
                      + param_bytes                      # weights + biases
                      + 4 * batch * action_size)         # Q out
    cost = pl.CostEstimate(flops=flops_per_row * batch, transcendentals=0,
                           bytes_accessed=bytes_accessed)

    q = pl.pallas_call(
        functools.partial(_mlp_kernel, num_hidden, action_size),
        out_shape=jax.ShapeDtypeStruct((batch, action_size), jnp.float32),
        grid=grid,
        in_specs=in_specs,
        out_specs=out_spec,
        compiler_params=pltpu.CompilerParams(
            dimension_semantics=("parallel",)),
        cost_estimate=cost,
    )(state, action_parameters, *tensors)

    return q


def init_params(key, state_size, action_parameter_size, action_size,
                hidden_layers=(32, 32), output_layer_init_std=None):
    """Mirror the PyTorch __init__:
    - hidden layers: kaiming_normal_(nonlinearity='leaky_relu', a=0)
        => std = sqrt(2 / fan_in), bias = 0
    - output layer: N(0, output_layer_init_std) if given, else zeros; bias = 0.
    Weights stored (in, out) == PyTorch W^T; biases as (1, out)."""
    in_dim = state_size + action_parameter_size
    dims = [in_dim] + list(hidden_layers)

    params = {}
    keys = jax.random.split(key, len(hidden_layers) + 1)
    for i, (d_in, d_out) in enumerate(zip(dims[:-1], dims[1:])):
        std = (2.0 / d_in) ** 0.5
        params[f"w{i}"] = std * jax.random.normal(
            keys[i], (d_in, d_out), dtype=jnp.float32)
        params[f"b{i}"] = jnp.zeros((1, d_out), dtype=jnp.float32)
    if output_layer_init_std is not None:
        params["wo"] = output_layer_init_std * jax.random.normal(
            keys[-1], (dims[-1], action_size), dtype=jnp.float32)
    else:
        params["wo"] = jnp.zeros((dims[-1], action_size), dtype=jnp.float32)
    params["bo"] = jnp.zeros((1, action_size), dtype=jnp.float32)
    return params


def prepare_kernel_params(params, state_size, lane=LANE):
    """One-time prep:
    - split W0 along the (state | action_parameter) rows so the concat fuses,
    - zero-pad all feature widths to 128 lanes so every kernel load/compute is
      lane-dense (padded rows/cols contribute 0 -> math identical),
    - cast weights to bf16 (MXU operands); biases stay f32 (added post-matmul
      in the f32 accumulator).
    NOTE: bf16 operands are a deliberate precision trade (f32 accumulation is
    retained); validate against the RL training loop if Q precision matters.
    """
    num_hidden = sum(1 for k in params if k.startswith("w") and k != "wo")

    def rup(n):
        return ((n + lane - 1) // lane) * lane

    def pad2d(x, rows, cols):
        return jnp.pad(x, ((0, rows - x.shape[0]), (0, cols - x.shape[1])))

    w0 = params["w0"]                       # (S + P, H0)
    in_dim, h0 = w0.shape
    hp = rup(h0)
    tensors = [
        pad2d(w0[:state_size, :], state_size, hp).astype(jnp.bfloat16),          # w0_s
        pad2d(w0[state_size:, :], in_dim - state_size, hp).astype(jnp.bfloat16),  # w0_a
        pad2d(params["b0"], 1, hp),                                                # b0 (f32)
    ]
    flops_per_row = 2 * in_dim * hp
    prev_hp = hp
    for i in range(1, num_hidden):
        w, b = params[f"w{i}"], params[f"b{i}"]
        hp_i = rup(w.shape[1])
        tensors += [pad2d(w, prev_hp, hp_i).astype(jnp.bfloat16), pad2d(b, 1, hp_i)]
        flops_per_row += 2 * prev_hp * hp_i
        prev_hp = hp_i
    a = params["wo"].shape[1]
    a_pad = rup(a)
    tensors += [pad2d(params["wo"], prev_hp, a_pad).astype(jnp.bfloat16),
                pad2d(params["bo"], 1, a_pad)]
    flops_per_row += 2 * prev_hp * a_pad

    param_bytes = sum(int(t.size) * t.dtype.itemsize for t in tensors)
    return {
        "tensors": tensors,
        "num_hidden": num_hidden,
        "flops_per_row": flops_per_row,
        "param_bytes": param_bytes,
    }


def reference_forward(state, action_parameters, params):
    """Pure-JAX f32 reference mirroring the PyTorch forward (unpadded params)."""
    x = jnp.concatenate([state, action_parameters], axis=1)
    num_hidden = sum(1 for k in params if k.startswith("w") and k != "wo")
    for i in range(num_hidden):
        x = _leaky_relu(x @ params[f"w{i}"] + params[f"b{i}"])
    return x @ params["wo"] + params["bo"]


if __name__ == "__main__":
    # Small, forward-consistent shapes.
    batch = 2
    state_size = 12
    action_parameter_size = 4
    action_size = 3
    hidden_layers = (32, 32)

    key = jax.random.PRNGKey(0)
    k_state, k_ap, k_params = jax.random.split(key, 3)

    state = jax.random.normal(k_state, (batch, state_size), dtype=jnp.float32)
    action_parameters = jax.random.normal(
        k_ap, (batch, action_parameter_size), dtype=jnp.float32)

    # Use a nonzero output_layer_init_std so the correctness check isn't
    # trivially all-zeros (the module's default zero-init is also supported).
    params = init_params(k_params, state_size, action_parameter_size,
                         action_size, hidden_layers, output_layer_init_std=0.1)
    kernel_params = prepare_kernel_params(params, state_size)

    # Test 1: tiny batch, single grid step, narrow (B, A) output.
    q = qactor_forward(state, action_parameters, kernel_params, action_size)
    q = jax.block_until_ready(q)
    q_ref = reference_forward(state, action_parameters, params)
    assert q.shape == (batch, action_size)
    # bf16 MXU operands (f32 accumulate) -> slightly looser tolerance than f32.
    assert jnp.allclose(q, q_ref, atol=2e-2, rtol=2e-2), (
        f"max abs err {jnp.max(jnp.abs(q - q_ref))}")

    # Test 2: exercise the multi-tile batch grid ("parallel" axis, resident weights).
    big_batch = 256
    k_s2, k_a2 = jax.random.split(jax.random.PRNGKey(1), 2)
    state2 = jax.random.normal(k_s2, (big_batch, state_size), dtype=jnp.float32)
    ap2 = jax.random.normal(k_a2, (big_batch, action_parameter_size),
                            dtype=jnp.float32)
    q2 = qactor_forward(state2, ap2, kernel_params, action_size,
                        max_block_batch=128)
    q2 = jax.block_until_ready(q2)
    q2_ref = reference_forward(state2, ap2, params)
    assert q2.shape == (big_batch, action_size)
    assert jnp.allclose(q2, q2_ref, atol=2e-2, rtol=2e-2), (
        f"max abs err {jnp.max(jnp.abs(q2 - q2_ref))}")

    print("KERNEL_OK")
</pallas_src>

<mosaic_0001>
module attributes {stable_mosaic.version = 11 : i64} {
  func.func @_mlp_kernel(%arg0: i32, %arg1: memref<2x12xf32, #tpu.memory_space<vmem>>, %arg2: memref<2x4xf32, #tpu.memory_space<vmem>>, %arg3: memref<12x128xbf16, #tpu.memory_space<vmem>>, %arg4: memref<4x128xbf16, #tpu.memory_space<vmem>>, %arg5: memref<1x128xf32, #tpu.memory_space<vmem>>, %arg6: memref<128x128xbf16, #tpu.memory_space<vmem>>, %arg7: memref<1x128xf32, #tpu.memory_space<vmem>>, %arg8: memref<128x128xbf16, #tpu.memory_space<vmem>>, %arg9: memref<1x128xf32, #tpu.memory_space<vmem>>, %arg10: memref<2x3xf32, #tpu.memory_space<vmem>>) attributes {dimension_semantics = [#tpu.dimension_semantics<parallel>], iteration_bounds = array<i64: 1>, scalar_prefetch = 0 : i64, scratch_operands = 0 : i64, tpu.core_type = #tpu.core_type<tc>, window_params = [{transform_indices = @transform_0, window_bounds = array<i64: 2, 12>}, {transform_indices = @transform_1, window_bounds = array<i64: 2, 4>}, {pipeline_mode = #tpu.pipeline_mode<synchronous>, transform_indices = @transform_2, window_bounds = array<i64: 12, 128>}, {pipeline_mode = #tpu.pipeline_mode<synchronous>, transform_indices = @transform_3, window_bounds = array<i64: 4, 128>}, {pipeline_mode = #tpu.pipeline_mode<synchronous>, transform_indices = @transform_4, window_bounds = array<i64: 1, 128>}, {pipeline_mode = #tpu.pipeline_mode<synchronous>, transform_indices = @transform_5, window_bounds = array<i64: 128, 128>}, {pipeline_mode = #tpu.pipeline_mode<synchronous>, transform_indices = @transform_6, window_bounds = array<i64: 1, 128>}, {pipeline_mode = #tpu.pipeline_mode<synchronous>, transform_indices = @transform_7, window_bounds = array<i64: 128, 128>}, {pipeline_mode = #tpu.pipeline_mode<synchronous>, transform_indices = @transform_8, window_bounds = array<i64: 1, 128>}, {transform_indices = @transform_9, window_bounds = array<i64: 2, 3>}]} {
    %c0 = arith.constant 0 : index
    %c0_0 = arith.constant 0 : index
    %0 = vector.load %arg1[%c0, %c0_0] : memref<2x12xf32, #tpu.memory_space<vmem>>, vector<2x12xf32>
    %1 = arith.truncf %0 : vector<2x12xf32> to vector<2x12xbf16>
    %c0_1 = arith.constant 0 : index
    %c0_2 = arith.constant 0 : index
    %2 = vector.load %arg2[%c0_1, %c0_2] : memref<2x4xf32, #tpu.memory_space<vmem>>, vector<2x4xf32>
    %3 = arith.truncf %2 : vector<2x4xf32> to vector<2x4xbf16>
    %c0_3 = arith.constant 0 : index
    %c0_4 = arith.constant 0 : index
    %4 = vector.load %arg3[%c0_3, %c0_4] : memref<12x128xbf16, #tpu.memory_space<vmem>>, vector<12x128xbf16>
    %cst = arith.constant dense<0.000000e+00> : vector<2x128xf32>
    %5 = tpu.matmul %1, %4, %cst {dimension_numbers = #tpu.dot_dimension_numbers<[1], [0], [0], [1], [0, 0, 1, 1], [], []>} : vector<2x12xbf16>, vector<12x128xbf16>, vector<2x128xf32> -> vector<2x128xf32>
    %c0_5 = arith.constant 0 : index
    %c0_6 = arith.constant 0 : index
    %6 = vector.load %arg4[%c0_5, %c0_6] : memref<4x128xbf16, #tpu.memory_space<vmem>>, vector<4x128xbf16>
    %cst_7 = arith.constant dense<0.000000e+00> : vector<2x128xf32>
    %7 = tpu.matmul %3, %6, %cst_7 {dimension_numbers = #tpu.dot_dimension_numbers<[1], [0], [0], [1], [0, 0, 1, 1], [], []>} : vector<2x4xbf16>, vector<4x128xbf16>, vector<2x128xf32> -> vector<2x128xf32>
    %8 = arith.addf %5, %7 : vector<2x128xf32>
    %c0_8 = arith.constant 0 : index
    %c0_9 = arith.constant 0 : index
    %9 = vector.load %arg5[%c0_8, %c0_9] : memref<1x128xf32, #tpu.memory_space<vmem>>, vector<1x128xf32>
    %10 = vector.broadcast %9 : vector<1x128xf32> to vector<2x128xf32>
    %11 = arith.addf %8, %10 : vector<2x128xf32>
    %cst_10 = arith.constant 0.00999999977 : f32
    %12 = vector.broadcast %cst_10 : f32 to vector<2x128xf32>
    %13 = arith.mulf %12, %11 : vector<2x128xf32>
    %14 = arith.maximumf %11, %13 : vector<2x128xf32>
    %15 = arith.truncf %14 : vector<2x128xf32> to vector<2x128xbf16>
    %c0_11 = arith.constant 0 : index
    %c0_12 = arith.constant 0 : index
    %16 = vector.load %arg6[%c0_11, %c0_12] : memref<128x128xbf16, #tpu.memory_space<vmem>>, vector<128x128xbf16>
    %cst_13 = arith.constant dense<0.000000e+00> : vector<2x128xf32>
    %17 = tpu.matmul %15, %16, %cst_13 {dimension_numbers = #tpu.dot_dimension_numbers<[1], [0], [0], [1], [0, 0, 1, 1], [], []>} : vector<2x128xbf16>, vector<128x128xbf16>, vector<2x128xf32> -> vector<2x128xf32>
    %c0_14 = arith.constant 0 : index
    %c0_15 = arith.constant 0 : index
    %18 = vector.load %arg7[%c0_14, %c0_15] : memref<1x128xf32, #tpu.memory_space<vmem>>, vector<1x128xf32>
    %19 = vector.broadcast %18 : vector<1x128xf32> to vector<2x128xf32>
    %20 = arith.addf %17, %19 : vector<2x128xf32>
    %cst_16 = arith.constant 0.00999999977 : f32
    %21 = vector.broadcast %cst_16 : f32 to vector<2x128xf32>
    %22 = arith.mulf %21, %20 : vector<2x128xf32>
    %23 = arith.maximumf %20, %22 : vector<2x128xf32>
    %24 = arith.truncf %23 : vector<2x128xf32> to vector<2x128xbf16>
    %c0_17 = arith.constant 0 : index
    %c0_18 = arith.constant 0 : index
    %25 = vector.load %arg8[%c0_17, %c0_18] : memref<128x128xbf16, #tpu.memory_space<vmem>>, vector<128x128xbf16>
    %cst_19 = arith.constant dense<0.000000e+00> : vector<2x128xf32>
    %26 = tpu.matmul %24, %25, %cst_19 {dimension_numbers = #tpu.dot_dimension_numbers<[1], [0], [0], [1], [0, 0, 1, 1], [], []>} : vector<2x128xbf16>, vector<128x128xbf16>, vector<2x128xf32> -> vector<2x128xf32>
    %c0_20 = arith.constant 0 : index
    %c0_21 = arith.constant 0 : index
    %27 = vector.load %arg9[%c0_20, %c0_21] : memref<1x128xf32, #tpu.memory_space<vmem>>, vector<1x128xf32>
    %28 = vector.broadcast %27 : vector<1x128xf32> to vector<2x128xf32>
    %29 = arith.addf %26, %28 : vector<2x128xf32>
    %30 = vector.extract_strided_slice %29 {offsets = [0, 0], sizes = [2, 3], strides = [1, 1]} : vector<2x128xf32> to vector<2x3xf32>
    %c0_22 = arith.constant 0 : index
    %c0_23 = arith.constant 0 : index
    %31 = vector.load %arg10[%c0_22, %c0_23] : memref<2x3xf32, #tpu.memory_space<vmem>>, vector<2x3xf32>
    tpu.vector_store %arg10[%c0_22, %c0_23], %30 {strides = array<i32>} : memref<2x3xf32, #tpu.memory_space<vmem>>, vector<2x3xf32>,
    return
  }
  func.func @transform_0(%arg0: i32) -> (i32, i32) {
    %c0_i32 = arith.constant 0 : i32
    %c0_i32_0 = arith.constant 0 : i32
    return %arg0, %c0_i32 : i32, i32
  }
  func.func @transform_1(%arg0: i32) -> (i32, i32) {
    %c0_i32 = arith.constant 0 : i32
    %c0_i32_0 = arith.constant 0 : i32
    return %arg0, %c0_i32 : i32, i32
  }
  func.func @transform_2(%arg0: i32) -> (i32, i32) {
    %c0_i32 = arith.constant 0 : i32
    %c0_i32_0 = arith.constant 0 : i32
    %c0_i32_1 = arith.constant 0 : i32
    return %c0_i32, %c0_i32_0 : i32, i32
  }
  func.func @transform_3(%arg0: i32) -> (i32, i32) {
    %c0_i32 = arith.constant 0 : i32
    %c0_i32_0 = arith.constant 0 : i32
    %c0_i32_1 = arith.constant 0 : i32
    return %c0_i32, %c0_i32_0 : i32, i32
  }
  func.func @transform_4(%arg0: i32) -> (i32, i32) {
    %c0_i32 = arith.constant 0 : i32
    %c0_i32_0 = arith.constant 0 : i32
    %c0_i32_1 = arith.constant 0 : i32
    return %c0_i32, %c0_i32_0 : i32, i32
  }
  func.func @transform_5(%arg0: i32) -> (i32, i32) {
    %c0_i32 = arith.constant 0 : i32
    %c0_i32_0 = arith.constant 0 : i32
    %c0_i32_1 = arith.constant 0 : i32
    return %c0_i32, %c0_i32_0 : i32, i32
  }
  func.func @transform_6(%arg0: i32) -> (i32, i32) {
    %c0_i32 = arith.constant 0 : i32
    %c0_i32_0 = arith.constant 0 : i32
    %c0_i32_1 = arith.constant 0 : i32
    return %c0_i32, %c0_i32_0 : i32, i32
  }
  func.func @transform_7(%arg0: i32) -> (i32, i32) {
    %c0_i32 = arith.constant 0 : i32
    %c0_i32_0 = arith.constant 0 : i32
    %c0_i32_1 = arith.constant 0 : i32
    return %c0_i32, %c0_i32_0 : i32, i32
  }
  func.func @transform_8(%arg0: i32) -> (i32, i32) {
    %c0_i32 = arith.constant 0 : i32
    %c0_i32_0 = arith.constant 0 : i32
    %c0_i32_1 = arith.constant 0 : i32
    return %c0_i32, %c0_i32_0 : i32, i32
  }
  func.func @transform_9(%arg0: i32) -> (i32, i32) {
    %c0_i32 = arith.constant 0 : i32
    %c0_i32_0 = arith.constant 0 : i32
    return %arg0, %c0_i32 : i32, i32
  }
}

</mosaic_0001>

<llo_original>
// kernel: tpu_custom_call.1
$region0: #{tpu_custom_call.1}
  #allocation0 [shape = 'u32[]', space=smem, size = 0x4, offset = 0x4, fixed_abs, tag = 'smem constant byte address 0x4 - core index']
  #allocation1 [shape = 'u32[144,128]{1,0:T(1,128)}', space=vmem, size = 0x12000, scoped, tag = 'internal scratch']
  %s0 = inlined_call_operand.hbm [shape: f32[2,12], index: 0, kind: input, shape index: {}]
  %s1 = inlined_call_operand.hbm [shape: f32[2,4], index: 1, kind: input, shape index: {}]
  %s2 = inlined_call_operand.hbm [shape: bf16[12,128], index: 2, kind: input, shape index: {}]
  %s3 = inlined_call_operand.vmem [shape: bf16[4,128], index: 3, kind: input, shape index: {}]
  %s4 = inlined_call_operand.vmem [shape: f32[1,128], index: 4, kind: input, shape index: {}]
  %s5 = inlined_call_operand.hbm [shape: bf16[128,128], index: 5, kind: input, shape index: {}]
  %s6 = inlined_call_operand.vmem [shape: f32[1,128], index: 6, kind: input, shape index: {}]
  %s7 = inlined_call_operand.hbm [shape: bf16[128,128], index: 7, kind: input, shape index: {}]
  %s8 = inlined_call_operand.vmem [shape: f32[1,128], index: 8, kind: input, shape index: {}]
  %s9 = inlined_call_operand.hbm [shape: f32[2,3], index: 9, kind: output, shape index: {}]
  %s10 = sld [smem:[#allocation0]]
  $region66: #{tpu_custom_call.1} parent=0
    _
  %s12 = ssub.s32 1, %s10
  %s13 = scalar_select 0, %s12, %s10
  $region1: #{tpu_custom_call.1} parent=0
    #allocation2 [shape = 'u8[1024]{0}', space=vmem, size = 0x400, scoped, tag = 'input window, operand 0, single buffered']
    #allocation3 [shape = 's32[1]{0}', space=sflag, size = 0x4, scoped, tag = 'scoped memory for tpu_custom_call.1']
    #allocation4 [shape = 's32[1]{0}', space=sflag, size = 0x4, scoped, tag = 'scoped memory for tpu_custom_call.1']
    #allocation5 [shape = 'u8[1024]{0}', space=vmem, size = 0x400, scoped, tag = 'input window, operand 1, single buffered']
    #allocation6 [shape = 's32[1]{0}', space=sflag, size = 0x4, scoped, tag = 'scoped memory for tpu_custom_call.1']
    #allocation7 [shape = 'u8[4096]{0}', space=vmem, size = 0x1000, scoped, tag = 'input window, operand 2, single buffered']
    #allocation8 [shape = 'u8[32768]{0}', space=vmem, size = 0x8000, scoped, tag = 'input window, operand 5, single buffered']
    #allocation9 [shape = 's32[1]{0}', space=sflag, size = 0x4, scoped, tag = 'scoped memory for tpu_custom_call.1']
    #allocation10 [shape = 'u8[32768]{0}', space=vmem, size = 0x8000, scoped, tag = 'input window, operand 7, single buffered']
    #allocation11 [shape = 'u8[1024]{0}', space=vmem, size = 0x400, scoped, tag = 'output window, operand 0, single buffered']
    %14 = vsyncpa [#allocation3], 0
    %15 = vsyncpa [#allocation6], 0
    %16 = vsyncpa [#allocation9], 0
    %17 = vsyncpa [#allocation4], 0
    // Predicated region
    $region2: #{tpu_custom_call.1} parent=1 // pred_check
      _
    $region3: #{tpu_custom_call.1} parent=1 // pred_check_branch
      %19 = sbr.rel (0) target = $region5
    $region4: #{tpu_custom_call.1} parent=1 // pred_region
      %s21 = ssub.s32 32, 32
      %22 = vsyncadd [#allocation3], %s21
      %s24 = sshll.u32 [#allocation2], 4
      %s25 = int_to_ptr.vmem [resolvable:$true] %s24
      %27 = dma.hbm_to_vmem [thread:$0]  %s0, 32, %s25, [#allocation3]
    $region5: #{tpu_custom_call.1} parent=1 // pred_fallthru
      _
    // Predicated region
    $region6: #{tpu_custom_call.1} parent=1 // pred_check
      _
    $region7: #{tpu_custom_call.1} parent=1 // pred_check_branch
      %29 = sbr.rel (0) target = $region9
    $region8: #{tpu_custom_call.1} parent=1 // pred_region
      %s31 = ssub.s32 32, 32
      %32 = vsyncadd [#allocation6], %s31
      %s34 = sshll.u32 [#allocation5], 4
      %s35 = int_to_ptr.vmem [resolvable:$true] %s34
      %37 = dma.hbm_to_vmem [thread:$0]  %s1, 32, %s35, [#allocation6]
    $region9: #{tpu_custom_call.1} parent=1 // pred_fallthru
      _
    // Predicated region
    $region10: #{tpu_custom_call.1} parent=1 // pred_check
      _
    $region11: #{tpu_custom_call.1} parent=1 // pred_check_branch
      %39 = sbr.rel (0) target = $region13
    $region12: #{tpu_custom_call.1} parent=1 // pred_region
      %s41 = ssub.s32 128, 128
      %42 = vsyncadd [#allocation6], %s41
      %s43 = sshll.u32 [#allocation7], 4
      %s44 = int_to_ptr.vmem [resolvable:$true] %s43
      %49 = dma.hbm_to_vmem [thread:$0]  %s2, 128, %s44, [#allocation6], 64, 64, 4
    $region13: #{tpu_custom_call.1} parent=1 // pred_fallthru
      _
    // Predicated region
    $region14: #{tpu_custom_call.1} parent=1 // pred_check
      _
    $region15: #{tpu_custom_call.1} parent=1 // pred_check_branch
      %51 = sbr.rel (0) target = $region17
    $region16: #{tpu_custom_call.1} parent=1 // pred_region
      _
    $region17: #{tpu_custom_call.1} parent=1 // pred_fallthru
      _
    // Predicated region
    $region18: #{tpu_custom_call.1} parent=1 // pred_check
      _
    $region19: #{tpu_custom_call.1} parent=1 // pred_check_branch
      %53 = sbr.rel (0) target = $region21
    $region20: #{tpu_custom_call.1} parent=1 // pred_region
      _
    $region21: #{tpu_custom_call.1} parent=1 // pred_fallthru
      _
    // Predicated region
    $region22: #{tpu_custom_call.1} parent=1 // pred_check
      _
    $region23: #{tpu_custom_call.1} parent=1 // pred_check_branch
      %55 = sbr.rel (0) target = $region25
    $region24: #{tpu_custom_call.1} parent=1 // pred_region
      %s57 = ssub.s32 1024, 1024
      %58 = vsyncadd [#allocation9], %s57
      %s59 = sshll.u32 [#allocation8], 4
      %s60 = int_to_ptr.vmem [resolvable:$true] %s59
      %65 = dma.hbm_to_vmem [thread:$0]  %s5, 1024, %s60, [#allocation9], 64, 64, 4
    $region25: #{tpu_custom_call.1} parent=1 // pred_fallthru
      _
    // Predicated region
    $region26: #{tpu_custom_call.1} parent=1 // pred_check
      _
    $region27: #{tpu_custom_call.1} parent=1 // pred_check_branch
      %67 = sbr.rel (0) target = $region29
    $region28: #{tpu_custom_call.1} parent=1 // pred_region
      _
    $region29: #{tpu_custom_call.1} parent=1 // pred_fallthru
      _
    // Predicated region
    $region30: #{tpu_custom_call.1} parent=1 // pred_check
      _
    $region31: #{tpu_custom_call.1} parent=1 // pred_check_branch
      %69 = sbr.rel (0) target = $region33
    $region32: #{tpu_custom_call.1} parent=1 // pred_region
      %s71 = ssub.s32 1024, 1024
      %72 = vsyncadd [#allocation9], %s71
      %s73 = sshll.u32 [#allocation10], 4
      %s74 = int_to_ptr.vmem [resolvable:$true] %s73
      %79 = dma.hbm_to_vmem [thread:$0]  %s7, 1024, %s74, [#allocation9], 64, 64, 4
    $region33: #{tpu_custom_call.1} parent=1 // pred_fallthru
      _
    // Predicated region
    $region34: #{tpu_custom_call.1} parent=1 // pred_check
      _
    $region35: #{tpu_custom_call.1} parent=1 // pred_check_branch
      %81 = sbr.rel (0) target = $region37
    $region36: #{tpu_custom_call.1} parent=1 // pred_region
      _
    $region37: #{tpu_custom_call.1} parent=1 // pred_fallthru
      _
    // Predicated region
    $region38: #{tpu_custom_call.1} parent=1 // pred_check
      _
    $region39: #{tpu_custom_call.1} parent=1 // pred_check_branch
      %83 = sbr.rel (0) target = $region41
    $region40: #{tpu_custom_call.1} parent=1 // pred_region
      %84 = dma.done [#allocation3], 32
    $region41: #{tpu_custom_call.1} parent=1 // pred_fallthru
      _
    // Predicated region
    $region42: #{tpu_custom_call.1} parent=1 // pred_check
      _
    $region43: #{tpu_custom_call.1} parent=1 // pred_check_branch
      %86 = sbr.rel (0) target = $region45
    $region44: #{tpu_custom_call.1} parent=1 // pred_region
      %87 = dma.done [#allocation6], 32
    $region45: #{tpu_custom_call.1} parent=1 // pred_fallthru
      _
    // Predicated region
    $region46: #{tpu_custom_call.1} parent=1 // pred_check
      _
    $region47: #{tpu_custom_call.1} parent=1 // pred_check_branch
      %89 = sbr.rel (0) target = $region49
    $region48: #{tpu_custom_call.1} parent=1 // pred_region
      %90 = dma.done [#allocation6], 128
    $region49: #{tpu_custom_call.1} parent=1 // pred_fallthru
      _
    // Predicated region
    $region50: #{tpu_custom_call.1} parent=1 // pred_check
      _
    $region51: #{tpu_custom_call.1} parent=1 // pred_check_branch
      %92 = sbr.rel (0) target = $region53
    $region52: #{tpu_custom_call.1} parent=1 // pred_region
      %93 = dma.done [#allocation9], 1024
    $region53: #{tpu_custom_call.1} parent=1 // pred_fallthru
      _
    // Predicated region
    $region54: #{tpu_custom_call.1} parent=1 // pred_check
      _
    $region55: #{tpu_custom_call.1} parent=1 // pred_check_branch
      %95 = sbr.rel (0) target = $region57
    $region56: #{tpu_custom_call.1} parent=1 // pred_region
      %96 = dma.done [#allocation9], 1024
    $region57: #{tpu_custom_call.1} parent=1 // pred_fallthru
      _
    %v98 = vld [vmem:[#allocation2] sm:$0x3]
    %v99 = vpack.c.bf16 %v98, %v98
    %v100 = vld [vmem:[#allocation5] sm:$0x3]
    %v101 = vpack.c.bf16 %v100, %v100
    %v102 = vld [vmem:[#allocation7] sm:$0xf]
    %v103 = vld [vmem:[#allocation7 + $0x4] sm:$0x3]
    %v104 = vld [vmem:[%s3] sm:$0x3]
    %vm105 = vcmask 31744
    %v107 = vsel %vm105, %v101, 0
    %vm109 = vcmask 1041408
    %v111 = vsel %vm109, %v104, 0
    %113 = vmatprep.subr.bf16.mxu0 0
    %114 = vmatpush1.bf16.msra.mxu0 0
    %115 = vmatprep.subr.bf16.mxu0 0
    %116 = vmatpush1.bf16.msra.mxu0 0
    %117 = vmatprep.subr.bf16.mxu0 0
    %118 = vmatpush1.bf16.msra.mxu0 0
    %119 = vmatprep.subr.bf16.mxu0 0
    %120 = vmatpush1.bf16.msra.mxu0 0
    %121 = vmatprep.subr.bf16.mxu0 0
    %122 = vmatpush1.bf16.msra.mxu0 0
    %123 = vmatprep.subr.bf16.mxu0 0
    %124 = vmatpush1.bf16.msra.mxu0 0
    %125 = vmatprep.subr.bf16.mxu0 0
    %126 = vmatpush1.bf16.msra.mxu0 0
    %127 = vmatprep.subr.bf16.mxu0 0
    %128 = vmatpush1.bf16.msra.mxu0 %v111
    %129 = vmatprep.subr.bf16.mxu0 0
    %130 = vmatpush2.bf16.msra.mxu0 0
    %131 = vmatprep.subr.bf16.mxu0 0
    %132 = vmatpush2.bf16.msra.mxu0 0
    %133 = vmatprep.subr.bf16.mxu0 0
    %134 = vmatpush2.bf16.msra.mxu0 0
    %135 = vmatprep.subr.bf16.mxu0 0
    %136 = vmatpush2.bf16.msra.mxu0 0
    %137 = vmatprep.subr.bf16.mxu0 0
    %138 = vmatpush2.bf16.msra.mxu0 0
    %139 = vmatprep.subr.bf16.mxu0 0
    %140 = vmatpush2.bf16.msra.mxu0 0
    %141 = vmatprep.subr.bf16.mxu0 0
    %142 = vmatpush2.bf16.msra.mxu0 0
    %143 = vmatprep.subr.bf16.mxu0 0
    %144 = vmatpush2.bf16.msra.mxu0 0
    %145 = vmatprep.mubr.bf16.mxu0 0
    %146 = vmatmul.mubr.bf16.gmra.mxu0 %v107
    %v147 = vpop.f32.mrf.mxu0
    %v148 = vadd.f32 0.0, %v147
    %v149 = vpop.f32.mrf.mxu0
    %v150 = vpop.f32.mrf.mxu0
    %v151 = vpop.f32.mrf.mxu0
    %152 = vdwg.mxu0
    %v155 = vunpack.c.l.b16 %v102
    %v156 = vunpack.c.l.b16 %v103
    %v157 = vpack.c.b16 %v156, %v155
    %vm158 = vcmask 97280
    %v160 = vsel %vm158, %v99, 0
    %vm162 = vcmask 1045504
    %v164 = vsel %vm162, %v157, 0
    %166 = vmatprep.subr.bf16.mxu0 0
    %167 = vmatpush1.bf16.msra.mxu0 0
    %168 = vmatprep.subr.bf16.mxu0 0
    %169 = vmatpush1.bf16.msra.mxu0 0
    %170 = vmatprep.subr.bf16.mxu0 0
    %171 = vmatpush1.bf16.msra.mxu0 0
    %172 = vmatprep.subr.bf16.mxu0 0
    %173 = vmatpush1.bf16.msra.mxu0 0
    %174 = vmatprep.subr.bf16.mxu0 0
    %175 = vmatpush1.bf16.msra.mxu0 0
    %176 = vmatprep.subr.bf16.mxu0 0
    %177 = vmatpush1.bf16.msra.mxu0 0
    %178 = vmatprep.subr.bf16.mxu0 0
    %179 = vmatpush1.bf16.msra.mxu0 0
    %180 = vmatprep.subr.bf16.mxu0 0
    %181 = vmatpush1.bf16.msra.mxu0 %v164
    %182 = vmatprep.subr.bf16.mxu0 0
    %183 = vmatpush2.bf16.msra.mxu0 0
    %184 = vmatprep.subr.bf16.mxu0 0
    %185 = vmatpush2.bf16.msra.mxu0 0
    %186 = vmatprep.subr.bf16.mxu0 0
    %187 = vmatpush2.bf16.msra.mxu0 0
    %188 = vmatprep.subr.bf16.mxu0 0
    %189 = vmatpush2.bf16.msra.mxu0 0
    %190 = vmatprep.subr.bf16.mxu0 0
    %191 = vmatpush2.bf16.msra.mxu0 0
    %192 = vmatprep.subr.bf16.mxu0 0
    %193 = vmatpush2.bf16.msra.mxu0 0
    %194 = vmatprep.subr.bf16.mxu0 0
    %195 = vmatpush2.bf16.msra.mxu0 0
    %196 = vmatprep.subr.bf16.mxu0 0
    %197 = vmatpush2.bf16.msra.mxu0 0
    %198 = vmatprep.mubr.bf16.mxu0 0
    %199 = vmatmul.mubr.bf16.gmra.mxu0 %v160
    %v200 = vpop.f32.mrf.mxu0
    %v201 = vadd.f32 %v148, %v200
    %v202 = vpop.f32.mrf.mxu0
    %v203 = vpop.f32.mrf.mxu0
    %v204 = vpop.f32.mrf.mxu0
    %205 = vdwg.mxu0
    %v206 = vld [vmem:[%s4] sm:$0x1]
    %v208 = vlaneseq
    %v209 = vshrl.u32 %v208, 7
    %v210 = vsub.s32 0, %v209
    %v211 = vrot.slane %v206, %v210
    %v213 = vadd.f32 %v201, %v211
    %v214 = vmul.f32 %v213, 0.01
    %v215 = vmax.f32 %v213, %v214
    %v216 = vpack.c.bf16 %v215, %v215
    %v217 = vld [vmem:[#allocation8] sm:$0xf]
    %v218 = vld [vmem:[#allocation8 + $0x4] sm:$0xf]
    %v219 = vld [vmem:[#allocation8 + $0x8] sm:$0xf]
    %v220 = vld [vmem:[#allocation8 + $0xc] sm:$0xf]
    %v221 = vld [vmem:[#allocation8 + $0x10] sm:$0xf]
    %v222 = vld [vmem:[#allocation8 + $0x14] sm:$0xf]
    %v223 = vld [vmem:[#allocation8 + $0x18] sm:$0xf]
    %v224 = vld [vmem:[#allocation8 + $0x1c] sm:$0xf]
    %v225 = vld [vmem:[#allocation8 + $0x20] sm:$0xf]
    %v226 = vld [vmem:[#allocation8 + $0x24] sm:$0xf]
    %v227 = vld [vmem:[#allocation8 + $0x28] sm:$0xf]
    %v228 = vld [vmem:[#allocation8 + $0x2c] sm:$0xf]
    %v229 = vld [vmem:[#allocation8 + $0x30] sm:$0xf]
    %v230 = vld [vmem:[#allocation8 + $0x34] sm:$0xf]
    %v231 = vld [vmem:[#allocation8 + $0x38] sm:$0xf]
    %v232 = vld [vmem:[#allocation8 + $0x3c] sm:$0xf]
    %v233 = vld [vmem:[%s6] sm:$0x1]
    %v235 = vlaneseq
    %v236 = vshrl.u32 %v235, 7
    %v237 = vsub.s32 0, %v236
    %v238 = vrot.slane %v233, %v237
    %v256 = vunpack.c.l.b16 %v217
    %v257 = vunpack.c.l.b16 %v218
    %v258 = vunpack.c.l.b16 %v219
    %v259 = vunpack.c.l.b16 %v220
    %v260 = vunpack.c.l.b16 %v221
    %v261 = vunpack.c.l.b16 %v222
    %v262 = vunpack.c.l.b16 %v223
    %v263 = vunpack.c.l.b16 %v224
    %v264 = vunpack.c.l.b16 %v225
    %v265 = vunpack.c.l.b16 %v226
    %v266 = vunpack.c.l.b16 %v227
    %v267 = vunpack.c.l.b16 %v228
    %v268 = vunpack.c.l.b16 %v229
    %v269 = vunpack.c.l.b16 %v230
    %v270 = vunpack.c.l.b16 %v231
    %v271 = vunpack.c.l.b16 %v232
    %v272 = vpack.c.b16 %v257, %v256
    %v273 = vpack.c.b16 %v259, %v258
    %v274 = vpack.c.b16 %v261, %v260
    %v275 = vpack.c.b16 %v263, %v262
    %v276 = vpack.c.b16 %v265, %v264
    %v277 = vpack.c.b16 %v267, %v266
    %v278 = vpack.c.b16 %v269, %v268
    %v279 = vpack.c.b16 %v271, %v270
    %288 = vmatprep.subr.bf16.mxu0 0
    %289 = vmatpush1.bf16.msra.mxu0 %v279
    %290 = vmatprep.subr.bf16.mxu0 0
    %291 = vmatpush1.bf16.msra.mxu0 %v278
    %292 = vmatprep.subr.bf16.mxu0 0
    %293 = vmatpush1.bf16.msra.mxu0 %v277
    %294 = vmatprep.subr.bf16.mxu0 0
    %295 = vmatpush1.bf16.msra.mxu0 %v276
    %296 = vmatprep.subr.bf16.mxu0 0
    %297 = vmatpush1.bf16.msra.mxu0 %v275
    %298 = vmatprep.subr.bf16.mxu0 0
    %299 = vmatpush1.bf16.msra.mxu0 %v274
    %300 = vmatprep.subr.bf16.mxu0 0
    %301 = vmatpush1.bf16.msra.mxu0 %v273
    %302 = vmatprep.subr.bf16.mxu0 0
    %303 = vmatpush1.bf16.msra.mxu0 %v272
    %304 = vmatprep.subr.bf16.mxu0 0
    %305 = vmatpush2.bf16.msra.mxu0 0
    %306 = vmatprep.subr.bf16.mxu0 0
    %307 = vmatpush2.bf16.msra.mxu0 0
    %308 = vmatprep.subr.bf16.mxu0 0
    %309 = vmatpush2.bf16.msra.mxu0 0
    %310 = vmatprep.subr.bf16.mxu0 0
    %311 = vmatpush2.bf16.msra.mxu0 0
    %312 = vmatprep.subr.bf16.mxu0 0
    %313 = vmatpush2.bf16.msra.mxu0 0
    %314 = vmatprep.subr.bf16.mxu0 0
    %315 = vmatpush2.bf16.msra.mxu0 0
    %316 = vmatprep.subr.bf16.mxu0 0
    %317 = vmatpush2.bf16.msra.mxu0 0
    %318 = vmatprep.subr.bf16.mxu0 0
    %319 = vmatpush2.bf16.msra.mxu0 0
    %320 = vmatprep.mubr.bf16.mxu0 0
    %321 = vmatmul.mubr.bf16.gmra.mxu0 %v216
    %v322 = vpop.f32.mrf.mxu0
    %v323 = vadd.f32 %v238, %v322
    %v324 = vpop.f32.mrf.mxu0
    %v325 = vpop.f32.mrf.mxu0
    %v326 = vpop.f32.mrf.mxu0
    %327 = vdwg.mxu0
    %v328 = vmul.f32 %v323, 0.01
    %v329 = vmax.f32 %v323, %v328
    %v330 = vpack.c.bf16 %v329, %v329
    %v331 = vld [vmem:[#allocation10] sm:$0xf]
    %v332 = vld [vmem:[#allocation10 + $0x4] sm:$0xf]
    %v333 = vld [vmem:[#allocation10 + $0x8] sm:$0xf]
    %v334 = vld [vmem:[#allocation10 + $0xc] sm:$0xf]
    %v335 = vld [vmem:[#allocation10 + $0x10] sm:$0xf]
    %v336 = vld [vmem:[#allocation10 + $0x14] sm:$0xf]
    %v337 = vld [vmem:[#allocation10 + $0x18] sm:$0xf]
    %v338 = vld [vmem:[#allocation10 + $0x1c] sm:$0xf]
    %v339 = vld [vmem:[#allocation10 + $0x20] sm:$0xf]
    %v340 = vld [vmem:[#allocation10 + $0x24] sm:$0xf]
    %v341 = vld [vmem:[#allocation10 + $0x28] sm:$0xf]
    %v342 = vld [vmem:[#allocation10 + $0x2c] sm:$0xf]
    %v343 = vld [vmem:[#allocation10 + $0x30] sm:$0xf]
    %v344 = vld [vmem:[#allocation10 + $0x34] sm:$0xf]
    %v345 = vld [vmem:[#allocation10 + $0x38] sm:$0xf]
    %v346 = vld [vmem:[#allocation10 + $0x3c] sm:$0xf]
    %v347 = vld [vmem:[%s8] sm:$0x1]
    %v349 = vlaneseq
    %v350 = vshrl.u32 %v349, 7
    %v351 = vsub.s32 0, %v350
    %v352 = vrot.slane %v347, %v351
    %v370 = vunpack.c.l.b16 %v331
    %v371 = vunpack.c.l.b16 %v332
    %v372 = vunpack.c.l.b16 %v333
    %v373 = vunpack.c.l.b16 %v334
    %v374 = vunpack.c.l.b16 %v335
    %v375 = vunpack.c.l.b16 %v336
    %v376 = vunpack.c.l.b16 %v337
    %v377 = vunpack.c.l.b16 %v338
    %v378 = vunpack.c.l.b16 %v339
    %v379 = vunpack.c.l.b16 %v340
    %v380 = vunpack.c.l.b16 %v341
    %v381 = vunpack.c.l.b16 %v342
    %v382 = vunpack.c.l.b16 %v343
    %v383 = vunpack.c.l.b16 %v344
    %v384 = vunpack.c.l.b16 %v345
    %v385 = vunpack.c.l.b16 %v346
    %v386 = vpack.c.b16 %v371, %v370
    %v387 = vpack.c.b16 %v373, %v372
    %v388 = vpack.c.b16 %v375, %v374
    %v389 = vpack.c.b16 %v377, %v376
    %v390 = vpack.c.b16 %v379, %v378
    %v391 = vpack.c.b16 %v381, %v380
    %v392 = vpack.c.b16 %v383, %v382
    %v393 = vpack.c.b16 %v385, %v384
    %402 = vmatprep.subr.bf16.mxu0 0
    %403 = vmatpush1.bf16.msra.mxu0 %v393
    %404 = vmatprep.subr.bf16.mxu0 0
    %405 = vmatpush1.bf16.msra.mxu0 %v392
    %406 = vmatprep.subr.bf16.mxu0 0
    %407 = vmatpush1.bf16.msra.mxu0 %v391
    %408 = vmatprep.subr.bf16.mxu0 0
    %409 = vmatpush1.bf16.msra.mxu0 %v390
    %410 = vmatprep.subr.bf16.mxu0 0
    %411 = vmatpush1.bf16.msra.mxu0 %v389
    %412 = vmatprep.subr.bf16.mxu0 0
    %413 = vmatpush1.bf16.msra.mxu0 %v388
    %414 = vmatprep.subr.bf16.mxu0 0
    %415 = vmatpush1.bf16.msra.mxu0 %v387
    %416 = vmatprep.subr.bf16.mxu0 0
    %417 = vmatpush1.bf16.msra.mxu0 %v386
    %418 = vmatprep.subr.bf16.mxu0 0
    %419 = vmatpush2.bf16.msra.mxu0 0
    %420 = vmatprep.subr.bf16.mxu0 0
    %421 = vmatpush2.bf16.msra.mxu0 0
    %422 = vmatprep.subr.bf16.mxu0 0
    %423 = vmatpush2.bf16.msra.mxu0 0
    %424 = vmatprep.subr.bf16.mxu0 0
    %425 = vmatpush2.bf16.msra.mxu0 0
    %426 = vmatprep.subr.bf16.mxu0 0
    %427 = vmatpush2.bf16.msra.mxu0 0
    %428 = vmatprep.subr.bf16.mxu0 0
    %429 = vmatpush2.bf16.msra.mxu0 0
    %430 = vmatprep.subr.bf16.mxu0 0
    %431 = vmatpush2.bf16.msra.mxu0 0
    %432 = vmatprep.subr.bf16.mxu0 0
    %433 = vmatpush2.bf16.msra.mxu0 0
    %434 = vmatprep.mubr.bf16.mxu0 0
    %435 = vmatmul.mubr.bf16.gmra.mxu0 %v330
    %v436 = vpop.f32.mrf.mxu0
    %v437 = vadd.f32 %v352, %v436
    %v438 = vpop.f32.mrf.mxu0
    %v439 = vpop.f32.mrf.mxu0
    %v440 = vpop.f32.mrf.mxu0
    %441 = vdwg.mxu0
    %vm442 = vcmask 17408
    %443 = vst.msk [vmem:[#allocation11] sm:$0x3] %vm442, %v437
    // Predicated region
    $region58: #{tpu_custom_call.1} parent=1 // pred_check
      _
    $region59: #{tpu_custom_call.1} parent=1 // pred_check_branch
      %445 = sbr.rel (0) target = $region61
    $region60: #{tpu_custom_call.1} parent=1 // pred_region
      %s447 = ssub.s32 32, 32
      %448 = vsyncadd [#allocation4], %s447
      %s450 = sshll.u32 [#allocation11], 4
      %s451 = int_to_ptr.vmem [resolvable:$true] %s450
      %453 = dma.vmem_to_hbm [thread:$0]  %s451, 32, %s9, [#allocation4]
    $region61: #{tpu_custom_call.1} parent=1 // pred_fallthru
      _
    // Predicated region
    $region62: #{tpu_custom_call.1} parent=1 // pred_check
      _
    $region63: #{tpu_custom_call.1} parent=1 // pred_check_branch
      %455 = sbr.rel (0) target = $region65
    $region64: #{tpu_custom_call.1} parent=1 // pred_region
      %456 = dma.done [#allocation4], 32
    $region65: #{tpu_custom_call.1} parent=1 // pred_fallthru
      _
    %457 = vsyncpa [#allocation3], 1
    %458 = vsyncpa [#allocation6], 1
    %459 = vsyncpa [#allocation9], 1
    %460 = vsyncpa [#allocation4], 1

</llo_original>
